<compile_context>
chip_gen: v6e
topology: v6e:2x2x1
jax: 0.10.0
libtpu: 0.0.40
codegen_flags: <defaults>
</compile_context>

<pallas_src>
import functools

import jax
import jax.numpy as jnp
from jax.experimental import pallas as pl
from jax.experimental.pallas import tpu as pltpu

LEAKY_SLOPE = 0.01   # nn.LeakyReLU() default negative_slope
BN_EPS = 1e-5        # nn.BatchNorm2d default eps
_SUBLANE = 8         # f32 sublane width


def _round_up(v, m):
    return (v + m - 1) // m * m


# ---------------------------------------------------------------------------
# Wrapper-side layout helpers (single fused XLA rearrangement pass).
# ---------------------------------------------------------------------------
def _pooled_phases(x_nchw, cin_p):
    """Four stride-2 phases of the zero-bordered, channel-major megarow.

    Output (4, cin_p, N*Hp*Wp): phase p = (a, b) holds x[n, c, 2y+a, 2x+b] at
    lane n*Hp*Wp + (y+1)*Wp + (x+1); border lanes and padded channels are 0.
    The in-kernel max over the 4 phases is exactly MaxPool2d(2).
    """
    N, C, H, W = x_nchw.shape
    Ho, Wo = H // 2, W // 2
    Hp, Wp = Ho + 2, Wo + 2
    x6 = x_nchw.reshape(N, C, Ho, 2, Wo, 2)
    x6 = jnp.transpose(x6, (3, 5, 1, 0, 2, 4))                       # (2,2,C,N,Ho,Wo)
    x6 = jnp.pad(x6, ((0, 0), (0, 0), (0, cin_p - C), (0, 0), (1, 1), (1, 1)))
    return x6.reshape(4, cin_p, N * Hp * Wp)


def _valid_mask(N, Ho, Wo, Hp, Wp):
    """1.0 at columns of the valid-pixel window that are real output pixels."""
    Lv = N * Hp * Wp - 2 * Wp - 2
    q = jnp.arange(Lv)
    r = q % (Hp * Wp)
    valid = ((r // Wp) < Ho) & ((r % Wp) < Wo)
    return valid.astype(jnp.float32)[None, :]                        # (1, Lv)


def _pack_conv_params(w_oihw, gamma, beta, in_rows, out_rows):
    """OIHW conv weight -> (out_rows, 9*in_rows) bf16 with K ordered (dy, dx, cin)."""
    cout, cin = w_oihw.shape[0], w_oihw.shape[1]
    w = jnp.zeros((out_rows, in_rows, 3, 3), w_oihw.dtype).at[:cout, :cin].set(w_oihw)
    w2 = jnp.transpose(w, (0, 2, 3, 1)).reshape(out_rows, 9 * in_rows)
    g = jnp.zeros((out_rows, 1), jnp.float32).at[:cout, 0].set(gamma)
    b = jnp.zeros((out_rows, 1), jnp.float32).at[:cout, 0].set(beta)
    return w2.astype(jnp.bfloat16), g, b


# ---------------------------------------------------------------------------
# Fused kernel: maxpool(2) -> conv3x3+BN+LeakyReLU -> conv3x3+BN+LeakyReLU
# ---------------------------------------------------------------------------
def _conv_bn_lrelu(a, w_ref, g_ref, b_ref, mask, *, Wp, Lv, inv_n):
    """3x3/stride-1/pad-1 conv + training-mode BN + LeakyReLU on a megarow.

    `a` is a zero-bordered megarow (value or VMEM ref), shape (Cin_p, Lp); the
    9 taps are plain lane-offset slices, stacked along K for one MXU matmul.
    """
    taps = []
    for dy in range(3):
        for dx in range(3):
            off = dy * Wp + dx
            taps.append(a[:, off:off + Lv])
    kmat = jnp.concatenate(taps, axis=0).astype(jnp.bfloat16)        # (9*Cin_p, Lv)

    # Single large-K matmul, bf16 operands, f32 accumulation.  (Conv bias is
    # omitted: exactly absorbed by the training-mode BatchNorm batch mean.)
    acc = jnp.dot(w_ref[...], kmat, preferred_element_type=jnp.float32)  # (Cout, Lv)

    # Training-mode BatchNorm folded into one scale/shift FMA (one-pass stats).
    am = acc * mask                                                  # reused twice
    mean = jnp.sum(am, axis=1, keepdims=True) * inv_n
    ex2 = jnp.sum(am * acc, axis=1, keepdims=True) * inv_n
    var = jnp.maximum(ex2 - mean * mean, 0.0)                        # biased variance
    scale = g_ref[...] * jax.lax.rsqrt(var + BN_EPS)
    shift = b_ref[...] - mean * scale
    y = acc * scale + shift
    return jnp.maximum(y, LEAKY_SLOPE * y)                           # LeakyReLU(0.01)


def _bottleneck_kernel(phases_ref, mask_ref, w1_ref, g1_ref, b1_ref,
                       w2_ref, g2_ref, b2_ref, o_ref, a1_ref, *, Wp, inv_n):
    # phases_ref : (4, Cin_p, Lp)  stride-2 phases of the bordered megarow (f32)
    # mask_ref   : (1, Lv)         1.0 at real output pixels in the valid window
    # w*_ref     : (Cout, 9*Cin_p) packed 3x3 weights (bf16)
    # g*/b*_ref  : (Cout, 1)       BN gamma / beta (f32)
    # o_ref      : (c_out, Lv)     conv2 output on the valid-pixel window
    # a1_ref     : (Cmid_p, Lp)    VMEM scratch: re-bordered conv1 megarow
    Lv = mask_ref.shape[1]
    mask = mask_ref[...]

    # --- MaxPool2d(2): elementwise max of the four stride-2 phases (exact). ---
    pooled = jnp.maximum(jnp.maximum(phases_ref[0], phases_ref[1]),
                         jnp.maximum(phases_ref[2], phases_ref[3]))  # (Cin_p, Lp)

    # --- Conv1 (n -> 2n) + BN(batch stats) + LeakyReLU ---
    y1 = _conv_bn_lrelu(pooled, w1_ref, g1_ref, b1_ref, mask, Wp=Wp, Lv=Lv, inv_n=inv_n)

    # Re-border: zero the megarow scratch once, then place the masked conv1
    # output at the valid-window offset so conv2's tap slices see proper zero
    # padding at every image border.
    a1_ref[...] = jnp.zeros_like(a1_ref)
    a1_ref[:, Wp + 1:Wp + 1 + Lv] = y1 * mask

    # --- Conv2 (2n -> n) + BN + LeakyReLU (no output re-masking needed) ---
    y2 = _conv_bn_lrelu(a1_ref, w2_ref, g2_ref, b2_ref, mask, Wp=Wp, Lv=Lv, inv_n=inv_n)
    o_ref[...] = y2.astype(o_ref.dtype)                              # single full store


# ---------------------------------------------------------------------------
# Parameter handling
# ---------------------------------------------------------------------------
def init_params(n, key):
    """Deterministic synthetic parameters matching BottleNeck(n)'s PyTorch layouts."""
    a = 1
    k1, k2, k3, k4 = jax.random.split(key, 4)

    def conv_params(kw, kb, in_c, out_c):
        return {
            "w": 0.1 * jax.random.normal(kw, (out_c, in_c, 3, 3), jnp.float32),  # OIHW
            # The conv bias exists in the module, but under training-mode BatchNorm
            # it cancels exactly against the batch mean, so it never reaches a kernel.
            "b": 0.1 * jax.random.normal(kb, (out_c,), jnp.float32),
            "gamma": jnp.ones((out_c,), jnp.float32),    # BN weight default
            "beta": jnp.zeros((out_c,), jnp.float32),    # BN bias default
        }

    return {"c1": conv_params(k1, k2, a * n, 2 * a * n),
            "c2": conv_params(k3, k4, 2 * a * n, a * n)}


# ---------------------------------------------------------------------------
# BottleNeck forward
# ---------------------------------------------------------------------------
@jax.jit
def bottleneck_forward(x_nchw, params):
    N, C, H, W = x_nchw.shape
    assert H % 2 == 0 and W % 2 == 0, "MaxPool2d(2) path assumes even H, W"
    Ho, Wo = H // 2, W // 2
    Hp, Wp = Ho + 2, Wo + 2
    Lp = N * Hp * Wp
    Lv = Lp - 2 * (Wp + 1)
    n_valid = N * Ho * Wo

    c_mid = params["c1"]["w"].shape[0]                    # 2n
    c_out = params["c2"]["w"].shape[0]                    # n
    cin_p = _round_up(C, _SUBLANE)
    cmid_p = _round_up(c_mid, _SUBLANE)

    phases = _pooled_phases(x_nchw, cin_p)                # (4, cin_p, Lp)
    mask = _valid_mask(N, Ho, Wo, Hp, Wp)                 # (1, Lv)
    w1, g1, b1 = _pack_conv_params(params["c1"]["w"], params["c1"]["gamma"],
                                   params["c1"]["beta"], cin_p, cmid_p)
    w2, g2, b2 = _pack_conv_params(params["c2"]["w"], params["c2"]["gamma"],
                                   params["c2"]["beta"], cmid_p, c_out)

    kernel = functools.partial(_bottleneck_kernel, Wp=Wp, inv_n=1.0 / float(n_valid))
    y = pl.pallas_call(
        kernel,
        out_shape=jax.ShapeDtypeStruct((c_out, Lv), jnp.float32),
        scratch_shapes=[pltpu.VMEM((cmid_p, Lp), jnp.float32)],
        compiler_params=pltpu.CompilerParams(vmem_limit_bytes=64 << 20),
    )(phases, mask, w1, g1, b1, w2, g2, b2)

    # Map the valid-pixel window back to NCHW (one small XLA transpose).
    out = jnp.pad(y, ((0, 0), (Wp + 1, Wp + 1))).reshape(c_out, N, Hp, Wp)
    out = out[:, :, 1:1 + Ho, 1:1 + Wo]
    return jnp.transpose(out, (1, 0, 2, 3))               # -> (N, n, Ho, Wo)


if __name__ == "__main__":
    n = 4
    key = jax.random.PRNGKey(0)
    kx, kp = jax.random.split(key)
    x = jax.random.normal(kx, (2, n, 16, 16), jnp.float32)   # NCHW input
    params = init_params(n, kp)

    out = jax.block_until_ready(bottleneck_forward(x, params))
    assert out.shape == (2, n, 8, 8), out.shape
    assert bool(jnp.all(jnp.isfinite(out)))
    print("KERNEL_OK")
</pallas_src>

<mosaic_0001>
module attributes {stable_mosaic.version = 11 : i64} {
  func.func @_bottleneck_kernel(%arg0: memref<4x8x200xf32, #tpu.memory_space<vmem>>, %arg1: memref<1x178xf32, #tpu.memory_space<vmem>>, %arg2: memref<8x72xbf16, #tpu.memory_space<vmem>>, %arg3: memref<8x1xf32, #tpu.memory_space<vmem>>, %arg4: memref<8x1xf32, #tpu.memory_space<vmem>>, %arg5: memref<4x72xbf16, #tpu.memory_space<vmem>>, %arg6: memref<4x1xf32, #tpu.memory_space<vmem>>, %arg7: memref<4x1xf32, #tpu.memory_space<vmem>>, %arg8: memref<4x178xf32, #tpu.memory_space<vmem>>, %arg9: memref<8x200xf32, #tpu.memory_space<vmem>>) attributes {dimension_semantics = [], scalar_prefetch = 0 : i64, scratch_operands = 1 : i64, tpu.core_type = #tpu.core_type<tc>} {
    %c0 = arith.constant 0 : index
    %c0_0 = arith.constant 0 : index
    %0 = vector.load %arg1[%c0, %c0_0] : memref<1x178xf32, #tpu.memory_space<vmem>>, vector<1x178xf32>
    %c0_1 = arith.constant 0 : index
    %c0_2 = arith.constant 0 : index
    %c0_3 = arith.constant 0 : index
    %1 = vector.load %arg0[%c0_1, %c0_2, %c0_3] : memref<4x8x200xf32, #tpu.memory_space<vmem>>, vector<1x8x200xf32>
    %2 = vector.shape_cast %1 : vector<1x8x200xf32> to vector<8x200xf32>
    %c1 = arith.constant 1 : index
    %c0_4 = arith.constant 0 : index
    %c0_5 = arith.constant 0 : index
    %3 = vector.load %arg0[%c1, %c0_4, %c0_5] : memref<4x8x200xf32, #tpu.memory_space<vmem>>, vector<1x8x200xf32>
    %4 = vector.shape_cast %3 : vector<1x8x200xf32> to vector<8x200xf32>
    %5 = arith.maximumf %2, %4 : vector<8x200xf32>
    %c2 = arith.constant 2 : index
    %c0_6 = arith.constant 0 : index
    %c0_7 = arith.constant 0 : index
    %6 = vector.load %arg0[%c2, %c0_6, %c0_7] : memref<4x8x200xf32, #tpu.memory_space<vmem>>, vector<1x8x200xf32>
    %7 = vector.shape_cast %6 : vector<1x8x200xf32> to vector<8x200xf32>
    %c3 = arith.constant 3 : index
    %c0_8 = arith.constant 0 : index
    %c0_9 = arith.constant 0 : index
    %8 = vector.load %arg0[%c3, %c0_8, %c0_9] : memref<4x8x200xf32, #tpu.memory_space<vmem>>, vector<1x8x200xf32>
    %9 = vector.shape_cast %8 : vector<1x8x200xf32> to vector<8x200xf32>
    %10 = arith.maximumf %7, %9 : vector<8x200xf32>
    %11 = arith.maximumf %5, %10 : vector<8x200xf32>
    %12 = vector.extract_strided_slice %11 {offsets = [0, 0], sizes = [8, 178], strides = [1, 1]} : vector<8x200xf32> to vector<8x178xf32>
    %13 = vector.extract_strided_slice %11 {offsets = [0, 1], sizes = [8, 178], strides = [1, 1]} : vector<8x200xf32> to vector<8x178xf32>
    %14 = vector.extract_strided_slice %11 {offsets = [0, 2], sizes = [8, 178], strides = [1, 1]} : vector<8x200xf32> to vector<8x178xf32>
    %15 = vector.extract_strided_slice %11 {offsets = [0, 10], sizes = [8, 178], strides = [1, 1]} : vector<8x200xf32> to vector<8x178xf32>
    %16 = vector.extract_strided_slice %11 {offsets = [0, 11], sizes = [8, 178], strides = [1, 1]} : vector<8x200xf32> to vector<8x178xf32>
    %17 = vector.extract_strided_slice %11 {offsets = [0, 12], sizes = [8, 178], strides = [1, 1]} : vector<8x200xf32> to vector<8x178xf32>
    %18 = vector.extract_strided_slice %11 {offsets = [0, 20], sizes = [8, 178], strides = [1, 1]} : vector<8x200xf32> to vector<8x178xf32>
    %19 = vector.extract_strided_slice %11 {offsets = [0, 21], sizes = [8, 178], strides = [1, 1]} : vector<8x200xf32> to vector<8x178xf32>
    %20 = vector.extract_strided_slice %11 {offsets = [0, 22], sizes = [8, 178], strides = [1, 1]} : vector<8x200xf32> to vector<8x178xf32>
    %21 = tpu.concatenate %12, %13, %14, %15, %16, %17, %18, %19, %20 in 0 : vector<8x178xf32>, vector<8x178xf32>, vector<8x178xf32>, vector<8x178xf32>, vector<8x178xf32>, vector<8x178xf32>, vector<8x178xf32>, vector<8x178xf32>, vector<8x178xf32> -> vector<72x178xf32>
    %22 = arith.truncf %21 : vector<72x178xf32> to vector<72x178xbf16>
    %c0_10 = arith.constant 0 : index
    %c0_11 = arith.constant 0 : index
    %23 = vector.load %arg2[%c0_10, %c0_11] : memref<8x72xbf16, #tpu.memory_space<vmem>>, vector<8x72xbf16>
    %cst = arith.constant dense<0.000000e+00> : vector<8x178xf32>
    %24 = tpu.matmul %23, %22, %cst {dimension_numbers = #tpu.dot_dimension_numbers<[1], [0], [0], [1], [0, 0, 1, 1], [], []>} : vector<8x72xbf16>, vector<72x178xbf16>, vector<8x178xf32> -> vector<8x178xf32>
    %25 = vector.broadcast %0 : vector<1x178xf32> to vector<8x178xf32>
    %26 = arith.mulf %24, %25 : vector<8x178xf32>
    %cst_12 = arith.constant dense<0.000000e+00> : vector<8xf32>
    %27 = vector.multi_reduction <add>, %26, %cst_12 [1] : vector<8x178xf32> to vector<8xf32>
    %28 = vector.shape_cast %27 : vector<8xf32> to vector<8x1xf32>
    %cst_13 = arith.constant 7.812500e-03 : f32
    %29 = vector.broadcast %cst_13 : f32 to vector<8x1xf32>
    %30 = arith.mulf %28, %29 : vector<8x1xf32>
    %31 = arith.mulf %26, %24 : vector<8x178xf32>
    %cst_14 = arith.constant dense<0.000000e+00> : vector<8xf32>
    %32 = vector.multi_reduction <add>, %31, %cst_14 [1] : vector<8x178xf32> to vector<8xf32>
    %33 = vector.shape_cast %32 : vector<8xf32> to vector<8x1xf32>
    %cst_15 = arith.constant 7.812500e-03 : f32
    %34 = vector.broadcast %cst_15 : f32 to vector<8x1xf32>
    %35 = arith.mulf %33, %34 : vector<8x1xf32>
    %36 = arith.mulf %30, %30 : vector<8x1xf32>
    %37 = arith.subf %35, %36 : vector<8x1xf32>
    %cst_16 = arith.constant 0.000000e+00 : f32
    %38 = vector.broadcast %cst_16 : f32 to vector<8x1xf32>
    %39 = arith.maximumf %37, %38 : vector<8x1xf32>
    %c0_17 = arith.constant 0 : index
    %c0_18 = arith.constant 0 : index
    %40 = vector.load %arg3[%c0_17, %c0_18] : memref<8x1xf32, #tpu.memory_space<vmem>>, vector<8x1xf32>
    %cst_19 = arith.constant 9.99999974E-6 : f32
    %41 = vector.broadcast %cst_19 : f32 to vector<8x1xf32>
    %42 = arith.addf %39, %41 : vector<8x1xf32>
    %43 = math.rsqrt %42 : vector<8x1xf32>
    %44 = arith.mulf %40, %43 : vector<8x1xf32>
    %c0_20 = arith.constant 0 : index
    %c0_21 = arith.constant 0 : index
    %45 = vector.load %arg4[%c0_20, %c0_21] : memref<8x1xf32, #tpu.memory_space<vmem>>, vector<8x1xf32>
    %46 = arith.mulf %30, %44 : vector<8x1xf32>
    %47 = arith.subf %45, %46 : vector<8x1xf32>
    %48 = vector.broadcast %44 : vector<8x1xf32> to vector<8x178xf32>
    %49 = arith.mulf %24, %48 : vector<8x178xf32>
    %50 = vector.broadcast %47 : vector<8x1xf32> to vector<8x178xf32>
    %51 = arith.addf %49, %50 : vector<8x178xf32>
    %cst_22 = arith.constant 0.00999999977 : f32
    %52 = vector.broadcast %cst_22 : f32 to vector<8x178xf32>
    %53 = arith.mulf %52, %51 : vector<8x178xf32>
    %54 = arith.maximumf %51, %53 : vector<8x178xf32>
    %cst_23 = arith.constant 0.000000e+00 : f32
    %55 = vector.broadcast %cst_23 : f32 to vector<8x200xf32>
    %c0_24 = arith.constant 0 : index
    %c0_25 = arith.constant 0 : index
    %56 = vector.load %arg9[%c0_24, %c0_25] : memref<8x200xf32, #tpu.memory_space<vmem>>, vector<8x200xf32>
    tpu.vector_store %arg9[%c0_24, %c0_25], %55 {strides = array<i32>} : memref<8x200xf32, #tpu.memory_space<vmem>>, vector<8x200xf32>,
    %57 = vector.broadcast %0 : vector<1x178xf32> to vector<8x178xf32>
    %58 = arith.mulf %54, %57 : vector<8x178xf32>
    %c0_26 = arith.constant 0 : index
    %c11 = arith.constant 11 : index
    %59 = vector.load %arg9[%c0_26, %c11] : memref<8x200xf32, #tpu.memory_space<vmem>>, vector<8x178xf32>
    tpu.vector_store %arg9[%c0_26, %c11], %58 {strides = array<i32>} : memref<8x200xf32, #tpu.memory_space<vmem>>, vector<8x178xf32>,
    %c0_27 = arith.constant 0 : index
    %c0_28 = arith.constant 0 : index
    %60 = vector.load %arg9[%c0_27, %c0_28] : memref<8x200xf32, #tpu.memory_space<vmem>>, vector<8x178xf32>
    %c0_29 = arith.constant 0 : index
    %c1_30 = arith.constant 1 : index
    %61 = vector.load %arg9[%c0_29, %c1_30] : memref<8x200xf32, #tpu.memory_space<vmem>>, vector<8x178xf32>
    %c0_31 = arith.constant 0 : index
    %c2_32 = arith.constant 2 : index
    %62 = vector.load %arg9[%c0_31, %c2_32] : memref<8x200xf32, #tpu.memory_space<vmem>>, vector<8x178xf32>
    %c0_33 = arith.constant 0 : index
    %c10 = arith.constant 10 : index
    %63 = vector.load %arg9[%c0_33, %c10] : memref<8x200xf32, #tpu.memory_space<vmem>>, vector<8x178xf32>
    %c0_34 = arith.constant 0 : index
    %c11_35 = arith.constant 11 : index
    %64 = vector.load %arg9[%c0_34, %c11_35] : memref<8x200xf32, #tpu.memory_space<vmem>>, vector<8x178xf32>
    %c0_36 = arith.constant 0 : index
    %c12 = arith.constant 12 : index
    %65 = vector.load %arg9[%c0_36, %c12] : memref<8x200xf32, #tpu.memory_space<vmem>>, vector<8x178xf32>
    %c0_37 = arith.constant 0 : index
    %c20 = arith.constant 20 : index
    %66 = vector.load %arg9[%c0_37, %c20] : memref<8x200xf32, #tpu.memory_space<vmem>>, vector<8x178xf32>
    %c0_38 = arith.constant 0 : index
    %c21 = arith.constant 21 : index
    %67 = vector.load %arg9[%c0_38, %c21] : memref<8x200xf32, #tpu.memory_space<vmem>>, vector<8x178xf32>
    %c0_39 = arith.constant 0 : index
    %c22 = arith.constant 22 : index
    %68 = vector.load %arg9[%c0_39, %c22] : memref<8x200xf32, #tpu.memory_space<vmem>>, vector<8x178xf32>
    %69 = tpu.concatenate %60, %61, %62, %63, %64, %65, %66, %67, %68 in 0 : vector<8x178xf32>, vector<8x178xf32>, vector<8x178xf32>, vector<8x178xf32>, vector<8x178xf32>, vector<8x178xf32>, vector<8x178xf32>, vector<8x178xf32>, vector<8x178xf32> -> vector<72x178xf32>
    %70 = arith.truncf %69 : vector<72x178xf32> to vector<72x178xbf16>
    %c0_40 = arith.constant 0 : index
    %c0_41 = arith.constant 0 : index
    %71 = vector.load %arg5[%c0_40, %c0_41] : memref<4x72xbf16, #tpu.memory_space<vmem>>, vector<4x72xbf16>
    %cst_42 = arith.constant dense<0.000000e+00> : vector<4x178xf32>
    %72 = tpu.matmul %71, %70, %cst_42 {dimension_numbers = #tpu.dot_dimension_numbers<[1], [0], [0], [1], [0, 0, 1, 1], [], []>} : vector<4x72xbf16>, vector<72x178xbf16>, vector<4x178xf32> -> vector<4x178xf32>
    %73 = vector.broadcast %0 : vector<1x178xf32> to vector<4x178xf32>
    %74 = arith.mulf %72, %73 : vector<4x178xf32>
    %cst_43 = arith.constant dense<0.000000e+00> : vector<4xf32>
    %75 = vector.multi_reduction <add>, %74, %cst_43 [1] : vector<4x178xf32> to vector<4xf32>
    %76 = vector.shape_cast %75 : vector<4xf32> to vector<4x1xf32>
    %cst_44 = arith.constant 7.812500e-03 : f32
    %77 = vector.broadcast %cst_44 : f32 to vector<4x1xf32>
    %78 = arith.mulf %76, %77 : vector<4x1xf32>
    %79 = arith.mulf %74, %72 : vector<4x178xf32>
    %cst_45 = arith.constant dense<0.000000e+00> : vector<4xf32>
    %80 = vector.multi_reduction <add>, %79, %cst_45 [1] : vector<4x178xf32> to vector<4xf32>
    %81 = vector.shape_cast %80 : vector<4xf32> to vector<4x1xf32>
    %cst_46 = arith.constant 7.812500e-03 : f32
    %82 = vector.broadcast %cst_46 : f32 to vector<4x1xf32>
    %83 = arith.mulf %81, %82 : vector<4x1xf32>
    %84 = arith.mulf %78, %78 : vector<4x1xf32>
    %85 = arith.subf %83, %84 : vector<4x1xf32>
    %cst_47 = arith.constant 0.000000e+00 : f32
    %86 = vector.broadcast %cst_47 : f32 to vector<4x1xf32>
    %87 = arith.maximumf %85, %86 : vector<4x1xf32>
    %c0_48 = arith.constant 0 : index
    %c0_49 = arith.constant 0 : index
    %88 = vector.load %arg6[%c0_48, %c0_49] : memref<4x1xf32, #tpu.memory_space<vmem>>, vector<4x1xf32>
    %cst_50 = arith.constant 9.99999974E-6 : f32
    %89 = vector.broadcast %cst_50 : f32 to vector<4x1xf32>
    %90 = arith.addf %87, %89 : vector<4x1xf32>
    %91 = math.rsqrt %90 : vector<4x1xf32>
    %92 = arith.mulf %88, %91 : vector<4x1xf32>
    %c0_51 = arith.constant 0 : index
    %c0_52 = arith.constant 0 : index
    %93 = vector.load %arg7[%c0_51, %c0_52] : memref<4x1xf32, #tpu.memory_space<vmem>>, vector<4x1xf32>
    %94 = arith.mulf %78, %92 : vector<4x1xf32>
    %95 = arith.subf %93, %94 : vector<4x1xf32>
    %96 = vector.broadcast %92 : vector<4x1xf32> to vector<4x178xf32>
    %97 = arith.mulf %72, %96 : vector<4x178xf32>
    %98 = vector.broadcast %95 : vector<4x1xf32> to vector<4x178xf32>
    %99 = arith.addf %97, %98 : vector<4x178xf32>
    %cst_53 = arith.constant 0.00999999977 : f32
    %100 = vector.broadcast %cst_53 : f32 to vector<4x178xf32>
    %101 = arith.mulf %100, %99 : vector<4x178xf32>
    %102 = arith.maximumf %99, %101 : vector<4x178xf32>
    %c0_54 = arith.constant 0 : index
    %c0_55 = arith.constant 0 : index
    %103 = vector.load %arg8[%c0_54, %c0_55] : memref<4x178xf32, #tpu.memory_space<vmem>>, vector<4x178xf32>
    tpu.vector_store %arg8[%c0_54, %c0_55], %102 {strides = array<i32>} : memref<4x178xf32, #tpu.memory_space<vmem>>, vector<4x178xf32>,
    return
  }
}

</mosaic_0001>

<llo_original>
// kernel: bottleneck_forward.1
$region0: #{bottleneck_forward.1}
  #allocation0 [shape = 'u32[]', space=smem, size = 0x4, offset = 0x4, fixed_abs, tag = 'smem constant byte address 0x4 - core index']
  #allocation1 [shape = 'u32[144,128]{1,0:T(1,128)}', space=vmem, size = 0x12000, scoped, tag = 'internal scratch']
  #allocation2 [shape = 'f32[8,200]{1,0:T(8,128)}', space=vmem, size = 0x2000, scoped, tag = 'scratch operand']
  %s0 = inlined_call_operand.vmem [shape: f32[4,8,200], index: 0, kind: input, shape index: {}]
  %s1 = inlined_call_operand.vmem [shape: f32[1,178], index: 1, kind: input, shape index: {}]
  %s2 = inlined_call_operand.vmem [shape: bf16[8,72], index: 2, kind: input, shape index: {}]
  %s3 = inlined_call_operand.vmem [shape: f32[8,1], index: 3, kind: input, shape index: {}]
  %s4 = inlined_call_operand.vmem [shape: f32[8,1], index: 4, kind: input, shape index: {}]
  %s5 = inlined_call_operand.vmem [shape: bf16[4,72], index: 5, kind: input, shape index: {}]
  %s6 = inlined_call_operand.vmem [shape: f32[4,1], index: 6, kind: input, shape index: {}]
  %s7 = inlined_call_operand.vmem [shape: f32[4,1], index: 7, kind: input, shape index: {}]
  %s8 = inlined_call_operand.vmem [shape: f32[4,178], index: 8, kind: output, shape index: {}]
  %s9 = sld [smem:[#allocation0]]
  $region42: #{bottleneck_forward.1} parent=0
    _
  %s11 = ssub.s32 1, %s9
  %s12 = scalar_select 0, %s11, %s9
  // Predicated region
  $region2: #{bottleneck_forward.1} parent=0 // pred_check
    _
  $region3: #{bottleneck_forward.1} parent=0 // pred_check_branch
    %14 = sbr.rel (0) target = $region5
  $region4: #{bottleneck_forward.1} parent=0 // pred_region
    _
  $region5: #{bottleneck_forward.1} parent=0 // pred_fallthru
    _
  // Predicated region
  $region6: #{bottleneck_forward.1} parent=0 // pred_check
    _
  $region7: #{bottleneck_forward.1} parent=0 // pred_check_branch
    %16 = sbr.rel (0) target = $region9
  $region8: #{bottleneck_forward.1} parent=0 // pred_region
    _
  $region9: #{bottleneck_forward.1} parent=0 // pred_fallthru
    _
  // Predicated region
  $region10: #{bottleneck_forward.1} parent=0 // pred_check
    _
  $region11: #{bottleneck_forward.1} parent=0 // pred_check_branch
    %18 = sbr.rel (0) target = $region13
  $region12: #{bottleneck_forward.1} parent=0 // pred_region
    _
  $region13: #{bottleneck_forward.1} parent=0 // pred_fallthru
    _
  // Predicated region
  $region14: #{bottleneck_forward.1} parent=0 // pred_check
    _
  $region15: #{bottleneck_forward.1} parent=0 // pred_check_branch
    %20 = sbr.rel (0) target = $region17
  $region16: #{bottleneck_forward.1} parent=0 // pred_region
    _
  $region17: #{bottleneck_forward.1} parent=0 // pred_fallthru
    _
  // Predicated region
  $region18: #{bottleneck_forward.1} parent=0 // pred_check
    _
  $region19: #{bottleneck_forward.1} parent=0 // pred_check_branch
    %22 = sbr.rel (0) target = $region21
  $region20: #{bottleneck_forward.1} parent=0 // pred_region
    _
  $region21: #{bottleneck_forward.1} parent=0 // pred_fallthru
    _
  // Predicated region
  $region22: #{bottleneck_forward.1} parent=0 // pred_check
    _
  $region23: #{bottleneck_forward.1} parent=0 // pred_check_branch
    %24 = sbr.rel (0) target = $region25
  $region24: #{bottleneck_forward.1} parent=0 // pred_region
    _
  $region25: #{bottleneck_forward.1} parent=0 // pred_fallthru
    _
  // Predicated region
  $region26: #{bottleneck_forward.1} parent=0 // pred_check
    _
  $region27: #{bottleneck_forward.1} parent=0 // pred_check_branch
    %26 = sbr.rel (0) target = $region29
  $region28: #{bottleneck_forward.1} parent=0 // pred_region
    _
  $region29: #{bottleneck_forward.1} parent=0 // pred_fallthru
    _
  // Predicated region
  $region30: #{bottleneck_forward.1} parent=0 // pred_check
    _
  $region31: #{bottleneck_forward.1} parent=0 // pred_check_branch
    %28 = sbr.rel (0) target = $region33
  $region32: #{bottleneck_forward.1} parent=0 // pred_region
    _
  $region33: #{bottleneck_forward.1} parent=0 // pred_fallthru
    _
  %v30 = vld [vmem:[%s1] sm:$0x3]
  %v31 = vld [vmem:[%s0] sm:$0xff]
  %v32 = vld [vmem:[%s0 + $0x8] sm:$0xff]
  %s33 = scalar_lea.vmem %s0, 16
  %v34 = vld [vmem:[%s33] sm:$0xff]
  %v35 = vld [vmem:[%s33 + $0x8] sm:$0xff]
  %v36 = vmax.f32 %v31, %v34
  %v37 = vmax.f32 %v32, %v35
  %s38 = scalar_lea.vmem %s0, 32
  %v39 = vld [vmem:[%s38] sm:$0xff]
  %v40 = vld [vmem:[%s38 + $0x8] sm:$0xff]
  %s41 = scalar_lea.vmem %s0, 48
  %v42 = vld [vmem:[%s41] sm:$0xff]
  %v43 = vld [vmem:[%s41 + $0x8] sm:$0xff]
  %v44 = vmax.f32 %v39, %v42
  %v45 = vmax.f32 %v40, %v43
  %v46 = vmax.f32 %v36, %v44
  %v47 = vmax.f32 %v37, %v45
  %50 = vrot.lane.b32.xlu0 %v46, 127
  %v51 = vpop.permute.xlu0 %50
  %52 = vrot.lane.b32.xlu0 %v47, 127
  %v53 = vpop.permute.xlu0 %52
  %vm54 = vcmask 1039360
  %v55 = vsel %vm54, %v51, %v53
  %58 = vrot.lane.b32.xlu0 %v46, 126
  %v59 = vpop.permute.xlu0 %58
  %60 = vrot.lane.b32.xlu0 %v47, 126
  %v61 = vpop.permute.xlu0 %60
  %vm62 = vcmask 1031168
  %v63 = vsel %vm62, %v59, %v61
  %66 = vrot.lane.b32.xlu0 %v46, 118
  %v67 = vpop.permute.xlu0 %66
  %68 = vrot.lane.b32.xlu0 %v47, 118
  %v69 = vpop.permute.xlu0 %68
  %vm70 = vcmask 965632
  %v71 = vsel %vm70, %v67, %v69
  %74 = vrot.lane.b32.xlu0 %v46, 117
  %v75 = vpop.permute.xlu0 %74
  %76 = vrot.lane.b32.xlu0 %v47, 117
  %v77 = vpop.permute.xlu0 %76
  %vm78 = vcmask 957440
  %v79 = vsel %vm78, %v75, %v77
  %82 = vrot.lane.b32.xlu0 %v46, 116
  %v83 = vpop.permute.xlu0 %82
  %84 = vrot.lane.b32.xlu0 %v47, 116
  %v85 = vpop.permute.xlu0 %84
  %vm86 = vcmask 949248
  %v87 = vsel %vm86, %v83, %v85
  %90 = vrot.lane.b32.xlu0 %v46, 108
  %v91 = vpop.permute.xlu0 %90
  %92 = vrot.lane.b32.xlu0 %v47, 108
  %v93 = vpop.permute.xlu0 %92
  %vm94 = vcmask 883712
  %v95 = vsel %vm94, %v91, %v93
  %98 = vrot.lane.b32.xlu0 %v46, 107
  %v99 = vpop.permute.xlu0 %98
  %100 = vrot.lane.b32.xlu0 %v47, 107
  %v101 = vpop.permute.xlu0 %100
  %vm102 = vcmask 875520
  %v103 = vsel %vm102, %v99, %v101
  %106 = vrot.lane.b32.xlu0 %v46, 106
  %v107 = vpop.permute.xlu0 %106
  %108 = vrot.lane.b32.xlu0 %v47, 106
  %v109 = vpop.permute.xlu0 %108
  %vm110 = vcmask 867328
  %v111 = vsel %vm110, %v107, %v109
  %v114 = vpack.c.bf16 %v55, %v46
  %v115 = vpack.c.bf16 %v53, %v47
  %v116 = vpack.c.bf16 %v71, %v63
  %v117 = vpack.c.bf16 %v69, %v61
  %v118 = vpack.c.bf16 %v87, %v79
  %v119 = vpack.c.bf16 %v85, %v77
  %v120 = vpack.c.bf16 %v103, %v95
  %v121 = vpack.c.bf16 %v101, %v93
  %v122 = vpack.c.bf16 %v111, %v111
  %v123 = vpack.c.bf16 %v109, %v109
  %v124 = vld [vmem:[%s2] sm:$0xf]
  %vm125 = vcmask 588800
  %v127 = vsel %vm125, %v124, 0
  %vm129 = vcmask 1043456
  %v131 = vsel %vm129, %v122, 0
  %v134 = vsel %vm129, %v123, 0
  %136 = vmatprep.subr.bf16.mxu0 0
  %137 = vmatpush1.bf16.msra.mxu0 0
  %138 = vmatprep.subr.bf16.mxu0 0
  %139 = vmatpush1.bf16.msra.mxu0 0
  %140 = vmatprep.subr.bf16.mxu0 0
  %141 = vmatpush1.bf16.msra.mxu0 0
  %142 = vmatprep.subr.bf16.mxu0 %v134
  %143 = vmatpush1.bf16.msra.mxu0 %v131
  %144 = vmatprep.subr.bf16.mxu0 %v121
  %145 = vmatpush1.bf16.msra.mxu0 %v120
  %146 = vmatprep.subr.bf16.mxu0 %v119
  %147 = vmatpush1.bf16.msra.mxu0 %v118
  %148 = vmatprep.subr.bf16.mxu0 %v117
  %149 = vmatpush1.bf16.msra.mxu0 %v116
  %150 = vmatprep.subr.bf16.mxu0 %v115
  %151 = vmatpush1.bf16.msra.mxu0 %v114
  %152 = vmatprep.subr.bf16.mxu0 0
  %153 = vmatpush2.bf16.msra.mxu0 0
  %154 = vmatprep.subr.bf16.mxu0 0
  %155 = vmatpush2.bf16.msra.mxu0 0
  %156 = vmatprep.subr.bf16.mxu0 0
  %157 = vmatpush2.bf16.msra.mxu0 0
  %158 = vmatprep.subr.bf16.mxu0 0
  %159 = vmatpush2.bf16.msra.mxu0 0
  %160 = vmatprep.subr.bf16.mxu0 0
  %161 = vmatpush2.bf16.msra.mxu0 0
  %162 = vmatprep.subr.bf16.mxu0 0
  %163 = vmatpush2.bf16.msra.mxu0 0
  %164 = vmatprep.subr.bf16.mxu0 0
  %165 = vmatpush2.bf16.msra.mxu0 0
  %166 = vmatprep.subr.bf16.mxu0 0
  %167 = vmatpush2.bf16.msra.mxu0 0
  %168 = vmatprep.mubr.bf16.mxu0 0
  %169 = vmatmul.mubr.bf16.gmra.mxu0 %v127
  %v170 = vpop.f32.mrf.mxu0
  %v171 = vadd.f32 0.0, %v170
  %v172 = vpop.f32.mrf.mxu0
  %v173 = vadd.f32 0.0, %v172
  %v174 = vpop.f32.mrf.mxu0
  %v175 = vpop.f32.mrf.mxu0
  %176 = vdwg.mxu0
  %v178 = vlaneseq
  %v179 = vshrl.u32 %v178, 7
  %v180 = vsub.s32 0, %v179
  %v181 = vrot.slane %v30, %v180
  %v182 = vlaneseq
  %v183 = vshrl.u32 %v182, 7
  %v184 = vsub.s32 1, %v183
  %v185 = vrot.slane %v30, %v184
  %v188 = vmul.f32 %v171, %v181
  %v189 = vmul.f32 %v173, %v185
  %vm190 = vcmask 408576
  %v191 = vsel %vm190, %v189, 0.0
  %v192 = vadd.f32 %v188, %v191
  %193 = vadd.xlane.f32.xlu0 %v192
  %v194 = vpop.xlane.xlu0 %193
  %v195 = vmul.f32 %v194, 0.0078125
  %v196 = vmul.f32 %v188, %v171
  %v197 = vmul.f32 %v189, %v173
  %v198 = vsel %vm190, %v197, 0.0
  %v199 = vadd.f32 %v196, %v198
  %200 = vadd.xlane.f32.xlu0 %v199
  %v201 = vpop.xlane.xlu0 %200
  %v202 = vmul.f32 %v201, 0.0078125
  %v203 = vmul.f32 %v195, %v195
  %v204 = vsub.f32 %v202, %v203
  %v205 = vmax.f32 %v204, 0.0
  %v206 = vld [vmem:[%s3] sm:$0xff]
  %v207 = vadd.f32 %v205, 1e-05
  %v208 = vrsqrt.pop %v207
  %v209 = vmul.f32 %v206, %v208
  %v210 = vld [vmem:[%s4] sm:$0xff]
  %v211 = vmul.f32 %v195, %v209
  %v212 = vsub.f32 %v210, %v211
  %214 = vset.pattern.permute.xlu0 0
  %215 = vperm.xlu0 %214, %v209
  %v216 = vpop.permute.xlu0 %215
  %v218 = vmul.f32 %v171, %v216
  %v219 = vmul.f32 %v173, %v216
  %221 = vset.pattern.permute.xlu0 0
  %222 = vperm.xlu0 %221, %v212
  %v223 = vpop.permute.xlu0 %222
  %v225 = vadd.f32 %v218, %v223
  %v226 = vadd.f32 %v219, %v223
  %v227 = vmul.f32 %v225, 0.01
  %v228 = vmul.f32 %v226, 0.01
  %v229 = vmax.f32 %v225, %v227
  %v230 = vmax.f32 %v226, %v228
  %231 = vst [vmem:[#allocation2] sm:$0xff] 0.0
  %232 = vst.msk [vmem:[#allocation2 + $0x8] sm:$0xff] %vm125, 0.0
  %v233 = vmul.f32 %v229, %v181
  %v234 = vmul.f32 %v230, %v185
  %237 = vrot.lane.b32.xlu0 %v233, 11
  %v238 = vpop.permute.xlu0 %237
  %239 = vrot.lane.b32.xlu0 %v234, 11
  %v240 = vpop.permute.xlu0 %239
  %vm241 = vcmask 89088
  %v242 = vsel %vm241, %v238, %v240
  %vm245 = vcmask 1047640
  %246 = vst.msk [vmem:[#allocation2] sm:$0xff] %vm245, %v238
  %vm247 = vcmask 498688
  %248 = vst.msk [vmem:[#allocation2 + $0x8] sm:$0xff] %vm247, %v242
  %v249 = vld [vmem:[#allocation2] sm:$0xff]
  %v250 = vld [vmem:[#allocation2 + $0x8] sm:$0xff]
  %253 = vrot.lane.b32.xlu0 %v249, 127
  %v254 = vpop.permute.xlu0 %253
  %255 = vrot.lane.b32.xlu0 %v250, 127
  %v256 = vpop.permute.xlu0 %255
  %v257 = vsel %vm54, %v254, %v256
  %260 = vrot.lane.b32.xlu0 %v249, 126
  %v261 = vpop.permute.xlu0 %260
  %262 = vrot.lane.b32.xlu0 %v250, 126
  %v263 = vpop.permute.xlu0 %262
  %v264 = vsel %vm62, %v261, %v263
  %267 = vrot.lane.b32.xlu0 %v249, 118
  %v268 = vpop.permute.xlu0 %267
  %269 = vrot.lane.b32.xlu0 %v250, 118
  %v270 = vpop.permute.xlu0 %269
  %v271 = vsel %vm70, %v268, %v270
  %274 = vrot.lane.b32.xlu0 %v249, 117
  %v275 = vpop.permute.xlu0 %274
  %276 = vrot.lane.b32.xlu0 %v250, 117
  %v277 = vpop.permute.xlu0 %276
  %v278 = vsel %vm78, %v275, %v277
  %281 = vrot.lane.b32.xlu0 %v249, 116
  %v282 = vpop.permute.xlu0 %281
  %283 = vrot.lane.b32.xlu0 %v250, 116
  %v284 = vpop.permute.xlu0 %283
  %v285 = vsel %vm86, %v282, %v284
  %288 = vrot.lane.b32.xlu0 %v249, 108
  %v289 = vpop.permute.xlu0 %288
  %290 = vrot.lane.b32.xlu0 %v250, 108
  %v291 = vpop.permute.xlu0 %290
  %v292 = vsel %vm94, %v289, %v291
  %295 = vrot.lane.b32.xlu0 %v249, 107
  %v296 = vpop.permute.xlu0 %295
  %297 = vrot.lane.b32.xlu0 %v250, 107
  %v298 = vpop.permute.xlu0 %297
  %v299 = vsel %vm102, %v296, %v298
  %302 = vrot.lane.b32.xlu0 %v249, 106
  %v303 = vpop.permute.xlu0 %302
  %304 = vrot.lane.b32.xlu0 %v250, 106
  %v305 = vpop.permute.xlu0 %304
  %v306 = vsel %vm110, %v303, %v305
  %v309 = vpack.c.bf16 %v257, %v249
  %v310 = vpack.c.bf16 %v256, %v250
  %v311 = vpack.c.bf16 %v271, %v264
  %v312 = vpack.c.bf16 %v270, %v263
  %v313 = vpack.c.bf16 %v285, %v278
  %v314 = vpack.c.bf16 %v284, %v277
  %v315 = vpack.c.bf16 %v299, %v292
  %v316 = vpack.c.bf16 %v298, %v291
  %v317 = vpack.c.bf16 %v306, %v306
  %v318 = vpack.c.bf16 %v305, %v305
  %v319 = vld [vmem:[%s5] sm:$0x3]
  %v321 = vsel %vm125, %v319, 0
  %v324 = vsel %vm129, %v317, 0
  %v327 = vsel %vm129, %v318, 0
  %329 = vmatprep.subr.bf16.mxu0 0
  %330 = vmatpush1.bf16.msra.mxu0 0
  %331 = vmatprep.subr.bf16.mxu0 0
  %332 = vmatpush1.bf16.msra.mxu0 0
  %333 = vmatprep.subr.bf16.mxu0 0
  %334 = vmatpush1.bf16.msra.mxu0 0
  %335 = vmatprep.subr.bf16.mxu0 %v327
  %336 = vmatpush1.bf16.msra.mxu0 %v324
  %337 = vmatprep.subr.bf16.mxu0 %v316
  %338 = vmatpush1.bf16.msra.mxu0 %v315
  %339 = vmatprep.subr.bf16.mxu0 %v314
  %340 = vmatpush1.bf16.msra.mxu0 %v313
  %341 = vmatprep.subr.bf16.mxu0 %v312
  %342 = vmatpush1.bf16.msra.mxu0 %v311
  %343 = vmatprep.subr.bf16.mxu0 %v310
  %344 = vmatpush1.bf16.msra.mxu0 %v309
  %345 = vmatprep.subr.bf16.mxu0 0
  %346 = vmatpush2.bf16.msra.mxu0 0
  %347 = vmatprep.subr.bf16.mxu0 0
  %348 = vmatpush2.bf16.msra.mxu0 0
  %349 = vmatprep.subr.bf16.mxu0 0
  %350 = vmatpush2.bf16.msra.mxu0 0
  %351 = vmatprep.subr.bf16.mxu0 0
  %352 = vmatpush2.bf16.msra.mxu0 0
  %353 = vmatprep.subr.bf16.mxu0 0
  %354 = vmatpush2.bf16.msra.mxu0 0
  %355 = vmatprep.subr.bf16.mxu0 0
  %356 = vmatpush2.bf16.msra.mxu0 0
  %357 = vmatprep.subr.bf16.mxu0 0
  %358 = vmatpush2.bf16.msra.mxu0 0
  %359 = vmatprep.subr.bf16.mxu0 0
  %360 = vmatpush2.bf16.msra.mxu0 0
  %361 = vmatprep.mubr.bf16.mxu0 0
  %362 = vmatmul.mubr.bf16.gmra.mxu0 %v321
  %v363 = vpop.f32.mrf.mxu0
  %v364 = vadd.f32 0.0, %v363
  %v365 = vpop.f32.mrf.mxu0
  %v366 = vadd.f32 0.0, %v365
  %v367 = vpop.f32.mrf.mxu0
  %v368 = vpop.f32.mrf.mxu0
  %369 = vdwg.mxu0
  %v370 = vmul.f32 %v364, %v181
  %v371 = vmul.f32 %v366, %v185
  %v372 = vsel %vm129, %v370, 0.0
  %vm373 = vcmask 404480
  %v374 = vsel %vm373, %v371, 0.0
  %v375 = vadd.f32 %v372, %v374
  %376 = vadd.xlane.f32.xlu0 %v375
  %v377 = vpop.xlane.xlu0 %376
  %v378 = vmul.f32 %v377, 0.0078125
  %v379 = vmul.f32 %v370, %v364
  %v380 = vmul.f32 %v371, %v366
  %v381 = vsel %vm129, %v379, 0.0
  %v382 = vsel %vm373, %v380, 0.0
  %v383 = vadd.f32 %v381, %v382
  %384 = vadd.xlane.f32.xlu0 %v383
  %v385 = vpop.xlane.xlu0 %384
  %v386 = vmul.f32 %v385, 0.0078125
  %v387 = vmul.f32 %v378, %v378
  %v388 = vsub.f32 %v386, %v387
  %v389 = vmax.f32 %v388, 0.0
  %v390 = vld [vmem:[%s6] sm:$0xf]
  %v391 = vadd.f32 %v389, 1e-05
  %v392 = vrsqrt.pop %v391
  %v393 = vmul.f32 %v390, %v392
  %v394 = vld [vmem:[%s7] sm:$0xf]
  %v395 = vmul.f32 %v378, %v393
  %v396 = vsub.f32 %v394, %v395
  %398 = vset.pattern.permute.xlu0 0
  %399 = vperm.xlu0 %398, %v393
  %v400 = vpop.permute.xlu0 %399
  %v402 = vmul.f32 %v364, %v400
  %v403 = vmul.f32 %v366, %v400
  %405 = vset.pattern.permute.xlu0 0
  %406 = vperm.xlu0 %405, %v396
  %v407 = vpop.permute.xlu0 %406
  %v409 = vadd.f32 %v402, %v407
  %v410 = vadd.f32 %v403, %v407
  %v411 = vmul.f32 %v409, 0.01
  %v412 = vmul.f32 %v410, 0.01
  %v413 = vmax.f32 %v409, %v411
  %v414 = vmax.f32 %v410, %v412
  %v417 = vcombine.low %v413, %v414
  %vm419 = vcmask 408580
  %vm420 = vmor %vm419, %vm129
  %421 = vst.msk [vmem:[%s8] sm:$0xff] %vm420, %v417
  // Predicated region
  $region34: #{bottleneck_forward.1} parent=0 // pred_check
    _
  $region35: #{bottleneck_forward.1} parent=0 // pred_check_branch
    %423 = sbr.rel (0) target = $region37
  $region36: #{bottleneck_forward.1} parent=0 // pred_region
    _
  $region37: #{bottleneck_forward.1} parent=0 // pred_fallthru
    _
  // Predicated region
  $region38: #{bottleneck_forward.1} parent=0 // pred_check
    _
  $region39: #{bottleneck_forward.1} parent=0 // pred_check_branch
    %425 = sbr.rel (0) target = $region41
  $region40: #{bottleneck_forward.1} parent=0 // pred_region
    _
  $region41: #{bottleneck_forward.1} parent=0 // pred_fallthru
    _

</llo_original>
